<compile_context>
chip_gen: v5e
topology: v5e:2x2
jax: 0.10.0
libtpu: 0.0.40
codegen_flags: <defaults>
</compile_context>

<pallas_src>
import functools

import jax
import jax.numpy as jnp
from jax.experimental import pallas as pl
from jax.experimental.pallas import tpu as pltpu


def _elu(x):
    return jnp.where(x > 0, x, jnp.expm1(x))


def _round_up(v, m):
    return ((v + m - 1) // m) * m


def _choose_tiling(n, tq):
    """Sublane-aligned row tile and padded row count (n_pad % tq == 0)."""
    tq = max(8, min(_round_up(tq, 8), _round_up(n, 8)))
    n_pad = _round_up(n, tq)
    return tq, n_pad


def _vmem_limit_bytes():
    cap = 64 * 1024 * 1024  # conservative fallback (v7x per-core VMEM)
    try:
        cap = int(getattr(pltpu.get_tpu_info(), "vmem_capacity_bytes", cap))
    except Exception:
        pass
    return min(max(cap * 3 // 4, 32 * 1024 * 1024), 100 * 1024 * 1024)


# ----------------------------- projection kernel ------------------------------
def _proj_kernel(x_ref, w_ref, o_ref, *, compute_dtype):
    x = x_ref[...].astype(compute_dtype)
    w = w_ref[...].astype(compute_dtype)
    o_ref[...] = jnp.dot(x, w, preferred_element_type=jnp.float32).astype(o_ref.dtype)


def project(x, w, *, tq, out_dtype, compute_dtype, vmem_limit):
    """Row-tiled x @ w (head-batched, lane-padded weight)."""
    n, fin = x.shape
    fout = w.shape[1]
    assert n % tq == 0
    kernel = functools.partial(_proj_kernel, compute_dtype=compute_dtype)
    return pl.pallas_call(
        kernel,
        out_shape=jax.ShapeDtypeStruct((n, fout), out_dtype),
        grid_spec=pltpu.PrefetchScalarGridSpec(
            num_scalar_prefetch=0,
            grid=(n // tq,),
            in_specs=[
                pl.BlockSpec((tq, fin), lambda i: (i, 0)),
                pl.BlockSpec((fin, fout), lambda i: (0, 0)),
            ],
            out_specs=pl.BlockSpec((tq, fout), lambda i: (i, 0)),
        ),
        compiler_params=pltpu.CompilerParams(
            dimension_semantics=("parallel",),
            vmem_limit_bytes=vmem_limit,
        ),
    )(x, w)


# ------------------------------ attention kernel -------------------------------
def _attn_kernel(adj_ref, fsrc_ref, fdst_ref, hk_ref, o_ref, *,
                 alpha, nheads, f_out, final, valid_cols):
    """One query-tile step, all heads statically unrolled.

    adj_ref:  (TQ, N) int8 0/1 mask       fsrc_ref: (TQ, H) f32  (a_src . h_i per head)
    fdst_ref: (H, N)  f32 (a_dst . h_j)   hk_ref:   (N, H*F) resident key slab
    o_ref:    (TQ, H*F) concatenated output slab
    """
    adjf = adj_ref[...].astype(jnp.float32)        # converted once, reused by all heads
    fsrc = fsrc_ref[...]                           # (TQ, H)
    fdst = fdst_ref[...]                           # (H, N)

    for hh in range(nheads):
        # scores and edge weights: exp(-leakyrelu(f_src_i + f_dst_j)) on edges, 0 off-edge
        s = fsrc[:, hh:hh + 1] + fdst[hh:hh + 1, :]            # (TQ, N)
        neg = jnp.minimum(-s, -alpha * s)                      # == -leakyrelu(s, alpha)
        neg = jnp.minimum(neg, 60.0)                           # overflow clamp (no-op normally)
        e = jnp.exp(neg) * adjf                                # non-edges -> 0, no -inf/NaN path

        hk = hk_ref[:, hh * f_out:(hh + 1) * f_out]            # (N, F)  bf16 (hidden) / f32 (final)
        ec = e.astype(hk.dtype)
        hp = jnp.dot(ec, hk, preferred_element_type=jnp.float32)        # (TQ, F) value matmul
        ones = jnp.ones((ec.shape[1], 1), dtype=ec.dtype)
        rowsum = jnp.dot(ec, ones, preferred_element_type=jnp.float32)  # (TQ, 1) on the MXU
        rowsum = jnp.maximum(rowsum, 1e-30)                    # isolated / padded rows guard

        if final:
            hp = hp * (1.0 / rowsum)                           # exact: feeds log_softmax
        else:
            hp = hp * pl.reciprocal(rowsum, approx=True)       # EUP slot, ~free

        hp = jnp.where(hp > 0, hp, jnp.expm1(hp))              # ELU (hidden concat / final F.elu)

        if final:
            # masked log_softmax over the real (unpadded) classes
            col = jax.lax.broadcasted_iota(jnp.int32, hp.shape, 1)
            valid = col < valid_cols
            z = jnp.where(valid, hp, -jnp.inf)
            z = z - jnp.max(z, axis=1, keepdims=True)
            lse = jnp.log(jnp.sum(jnp.exp(z), axis=1, keepdims=True))
            hp = jnp.where(valid, z - lse, 0.0)

        o_ref[:, hh * f_out:(hh + 1) * f_out] = hp.astype(o_ref.dtype)


def gat_attention(adj_mask, f_src, f_dst, hk, *, f_out, nheads, alpha, final,
                  valid_cols, tq, vmem_limit):
    """Row-tiled multi-head attention with a fully resident key slab.

    adj_mask: (N, N) int8 0/1;  f_src: (N, H) f32;  f_dst: (H, N) f32;
    hk: (N, H*f_out) keys (bf16 or f32).  Output: (N, H*f_out) f32 (lane-dense concat).
    """
    n = adj_mask.shape[0]
    assert n % tq == 0
    assert f_out % 128 == 0
    assert f_src.shape == (n, nheads) and f_dst.shape == (nheads, n)
    assert hk.shape == (n, nheads * f_out)

    kernel = functools.partial(_attn_kernel, alpha=alpha, nheads=nheads, f_out=f_out,
                               final=final, valid_cols=valid_cols)
    return pl.pallas_call(
        kernel,
        out_shape=jax.ShapeDtypeStruct((n, nheads * f_out), jnp.float32),
        grid_spec=pltpu.PrefetchScalarGridSpec(
            num_scalar_prefetch=0,
            grid=(n // tq,),
            in_specs=[
                pl.BlockSpec((tq, n), lambda q: (q, 0)),              # adj tile (int8), 1 HBM pass
                pl.BlockSpec((tq, nheads), lambda q: (q, 0)),         # per-head a_src . h_i
                pl.BlockSpec((nheads, n), lambda q: (0, 0)),          # per-head a_dst . h_j (resident)
                pl.BlockSpec((n, nheads * f_out), lambda q: (0, 0)),  # key slab (resident, 1 HBM pass)
            ],
            out_specs=pl.BlockSpec((tq, nheads * f_out), lambda q: (q, 0)),
        ),
        compiler_params=pltpu.CompilerParams(
            dimension_semantics=("parallel",),   # megacore splits query rows, never heads
            vmem_limit_bytes=vmem_limit,
        ),
    )(adj_mask, f_src, f_dst, hk)


# --------------------------------- full forward ---------------------------------
def spgat_forward(x, adj, params, *, alpha, tq=256):
    """Full SpGAT forward (eval mode: dropout is identity)."""
    n, nfeat = x.shape
    nheads, _, nhid = params["W_heads"].shape
    nclass = params["W_out"].shape[1]

    f_h = _round_up(nhid, 128)        # lane-padded per-head hidden width
    f_o = _round_up(nclass, 128)      # lane-padded output width
    tq, n_pad = _choose_tiling(n, tq)
    vmem = _vmem_limit_bytes()

    # ---- padded inputs (plain-JAX glue) ----
    x_p = jnp.zeros((n_pad, nfeat), jnp.float32).at[:n].set(x)
    adj_mask = jnp.zeros((n_pad, n_pad), jnp.int8).at[:n, :n].set((adj != 0).astype(jnp.int8))

    # ---- hidden layer ----
    W = params["W_heads"]                                   # (H, F_in, nhid)
    a = params["a_heads"][:, 0, :]                          # (H, 2*nhid)

    # head-batched, lane-padded projection weight -> one bf16 matmul for all heads
    W_all = jnp.pad(W, ((0, 0), (0, 0), (0, f_h - nhid)))   # (H, F_in, f_h)
    W_all = jnp.transpose(W_all, (1, 0, 2)).reshape(nfeat, nheads * f_h)
    h_all = project(x_p, W_all, tq=tq, out_dtype=jnp.bfloat16,
                    compute_dtype=jnp.bfloat16, vmem_limit=vmem)       # (n_pad, H*f_h) bf16

    # hoisted score terms: f_src = (x@W_h)@a_src_h, f_dst = (x@W_h)@a_dst_h  (f32, tiny)
    wa_src = jnp.einsum("hfd,hd->fh", W, a[:, :nhid])        # (F_in, H)
    wa_dst = jnp.einsum("hfd,hd->fh", W, a[:, nhid:])
    f_src = x_p @ wa_src                                     # (n_pad, H)
    f_dst = (x_p @ wa_dst).T                                 # (H, n_pad)

    h_cat = gat_attention(adj_mask, f_src, f_dst, h_all,
                          f_out=f_h, nheads=nheads, alpha=alpha,
                          final=False, valid_cols=f_h, tq=tq, vmem_limit=vmem)  # (n_pad, H*f_h) f32

    # ---- output layer (single head, exact f32, nclass lane-padded) ----
    W_out = params["W_out"].reshape(nheads, nhid, nclass)
    W_out = jnp.pad(W_out, ((0, 0), (0, f_h - nhid), (0, f_o - nclass)))
    W_out = W_out.reshape(nheads * f_h, f_o)
    h_out = project(h_cat, W_out, tq=tq, out_dtype=jnp.float32,
                    compute_dtype=jnp.float32, vmem_limit=vmem)        # (n_pad, f_o) f32

    a_out = params["a_out"][0]                               # (2*nclass,)
    f_src_o = (h_out[:, :nclass] @ a_out[:nclass])[:, None]  # (n_pad, 1)
    f_dst_o = (h_out[:, :nclass] @ a_out[nclass:])[None, :]  # (1, n_pad)

    out = gat_attention(adj_mask, f_src_o, f_dst_o, h_out,
                        f_out=f_o, nheads=1, alpha=alpha,
                        final=True, valid_cols=nclass, tq=tq, vmem_limit=vmem)
    return out[:n, :nclass]


# ---------------- pure-JAX reference (for correctness check) ----------------
def _ref_layer(x, adj, w, a, alpha, concat):
    h = x @ w
    f_out = w.shape[1]
    f1 = h @ a[0, :f_out]
    f2 = h @ a[0, f_out:]
    s = f1[:, None] + f2[None, :]
    s = jnp.where(s > 0, s, alpha * s)
    e = jnp.where(adj != 0, jnp.exp(-s), 0.0)
    hp = (e @ h) / jnp.sum(e, axis=1, keepdims=True)
    return _elu(hp) if concat else hp


def _ref_forward(x, adj, params, alpha):
    hs = [_ref_layer(x, adj, params["W_heads"][i], params["a_heads"][i], alpha, True)
          for i in range(params["W_heads"].shape[0])]
    h = jnp.concatenate(hs, axis=1)
    out = _elu(_ref_layer(h, adj, params["W_out"], params["a_out"], alpha, False))
    return jax.nn.log_softmax(out, axis=1)


if __name__ == "__main__":
    # Small shapes that deliberately exercise the general padding paths:
    #   N=60   -> row-padded to 64 with TQ=16 (4 pipelined query tiles)
    #   nhid=64 -> per-head width lane-padded to 128
    #   nclass=7 -> output lane-padded to 128, masked log_softmax
    N, nfeat, nhid, nclass, nheads = 60, 48, 64, 7, 2
    alpha = 0.2
    TQ = 16

    key = jax.random.PRNGKey(0)
    kx, kadj1, kadj2, kw, ka, kwo, kao = jax.random.split(key, 7)

    x = jax.random.normal(kx, (N, nfeat), dtype=jnp.float32)

    # random weighted adjacency with self loops, then the module-level symmetrization
    mask = jax.random.uniform(kadj1, (N, N)) < 0.3
    vals = jax.random.uniform(kadj2, (N, N)) + 0.5
    adj = jnp.where(mask, vals, 0.0).astype(jnp.float32) + jnp.eye(N, dtype=jnp.float32)
    gt = adj.T > adj
    adj = adj + (jnp.multiply(adj.T, gt) - jnp.multiply(adj, gt))

    # deterministic synthetic parameters (xavier-ish scale)
    params = {
        "W_heads": 0.2 * jax.random.normal(kw, (nheads, nfeat, nhid), dtype=jnp.float32),
        "a_heads": 0.2 * jax.random.normal(ka, (nheads, 1, 2 * nhid), dtype=jnp.float32),
        "W_out":   0.2 * jax.random.normal(kwo, (nheads * nhid, nclass), dtype=jnp.float32),
        "a_out":   0.2 * jax.random.normal(kao, (1, 2 * nclass), dtype=jnp.float32),
    }

    out = jax.block_until_ready(spgat_forward(x, adj, params, alpha=alpha, tq=TQ))
    ref = _ref_forward(x, adj, params, alpha)

    assert out.shape == (N, nclass)
    assert bool(jnp.all(jnp.isfinite(out)))
    # bf16 value path in the hidden heads + approx reciprocal there: tolerance covers
    # bf16 rounding propagated through the out-layer projection, attention and
    # log_softmax (final layer itself runs in exact f32).
    assert bool(jnp.allclose(out, ref, rtol=5e-2, atol=1e-1)), "mismatch vs pure-JAX reference"

    print("KERNEL_OK")
</pallas_src>

<mosaic_0001>
module attributes {stable_mosaic.version = 11 : i64} {
  func.func @_proj_kernel(%arg0: i32, %arg1: memref<16x48xf32, #tpu.memory_space<vmem>>, %arg2: memref<48x256xf32, #tpu.memory_space<vmem>>, %arg3: memref<16x256xbf16, #tpu.memory_space<vmem>>) attributes {dimension_semantics = [#tpu.dimension_semantics<parallel>], iteration_bounds = array<i64: 4>, scalar_prefetch = 0 : i64, scratch_operands = 0 : i64, tpu.core_type = #tpu.core_type<tc>, window_params = [{transform_indices = @transform_0, window_bounds = array<i64: 16, 48>}, {pipeline_mode = #tpu.pipeline_mode<synchronous>, transform_indices = @transform_1, window_bounds = array<i64: 48, 256>}, {transform_indices = @transform_2, window_bounds = array<i64: 16, 256>}]} {
    %c0 = arith.constant 0 : index
    %c0_0 = arith.constant 0 : index
    %0 = vector.load %arg1[%c0, %c0_0] : memref<16x48xf32, #tpu.memory_space<vmem>>, vector<16x48xf32>
    %1 = arith.truncf %0 : vector<16x48xf32> to vector<16x48xbf16>
    %c0_1 = arith.constant 0 : index
    %c0_2 = arith.constant 0 : index
    %2 = vector.load %arg2[%c0_1, %c0_2] : memref<48x256xf32, #tpu.memory_space<vmem>>, vector<48x256xf32>
    %3 = arith.truncf %2 : vector<48x256xf32> to vector<48x256xbf16>
    %cst = arith.constant dense<0.000000e+00> : vector<16x256xf32>
    %4 = tpu.matmul %1, %3, %cst {dimension_numbers = #tpu.dot_dimension_numbers<[1], [0], [0], [1], [0, 0, 1, 1], [], []>} : vector<16x48xbf16>, vector<48x256xbf16>, vector<16x256xf32> -> vector<16x256xf32>
    %5 = arith.truncf %4 : vector<16x256xf32> to vector<16x256xbf16>
    %c0_3 = arith.constant 0 : index
    %c0_4 = arith.constant 0 : index
    %6 = vector.load %arg3[%c0_3, %c0_4] : memref<16x256xbf16, #tpu.memory_space<vmem>>, vector<16x256xbf16>
    tpu.vector_store %arg3[%c0_3, %c0_4], %5 {strides = array<i32>} : memref<16x256xbf16, #tpu.memory_space<vmem>>, vector<16x256xbf16>,
    return
  }
  func.func @transform_0(%arg0: i32) -> (i32, i32) {
    %c0_i32 = arith.constant 0 : i32
    %c0_i32_0 = arith.constant 0 : i32
    return %arg0, %c0_i32 : i32, i32
  }
  func.func @transform_1(%arg0: i32) -> (i32, i32) {
    %c0_i32 = arith.constant 0 : i32
    %c0_i32_0 = arith.constant 0 : i32
    %c0_i32_1 = arith.constant 0 : i32
    return %c0_i32, %c0_i32_0 : i32, i32
  }
  func.func @transform_2(%arg0: i32) -> (i32, i32) {
    %c0_i32 = arith.constant 0 : i32
    %c0_i32_0 = arith.constant 0 : i32
    return %arg0, %c0_i32 : i32, i32
  }
}

</mosaic_0001>

<llo_original>
// kernel: tpu_custom_call.1
$region0: #{tpu_custom_call.1}
  #allocation0 [shape = 'u32[]', space=smem, size = 0x4, offset = 0x4, fixed_abs, tag = 'smem constant byte address 0x4 - core index']
  #allocation1 [shape = 'u32[72,128]{1,0:T(1,128)}', space=vmem, size = 0x9000, scoped, tag = 'internal scratch']
  %s0 = inlined_call_operand.vmem [shape: f32[64,48], index: 0, kind: input, shape index: {}]
  %s1 = inlined_call_operand.vmem [shape: f32[48,256], index: 1, kind: input, shape index: {}]
  %s2 = inlined_call_operand.hbm [shape: bf16[64,256], index: 2, kind: output, shape index: {}]
  %s3 = sld [smem:[#allocation0]]
  $region41: #{tpu_custom_call.1} parent=0
    _
  %s5 = ssub.s32 1, %s3
  %s6 = scalar_select 0, %s5, %s3
  $region1: #{tpu_custom_call.1} parent=0
    #allocation2 [shape = 'u8[16384]{0}', space=vmem, size = 0x4000, scoped, tag = 'output window, operand 0']
    #allocation3 [shape = 's32[2]{0}', space=sflag, size = 0x8, scoped, tag = 'scoped memory for tpu_custom_call.1']
    %7 = vsyncpa [#allocation3], 0
    %s8 = scalar_lea.sflag [#allocation3], 1
    %9 = vsyncpa %s8, 0
    loop: start=0, step=1, limit=6
    $region2: #{tpu_custom_call.1} parent=1 // loop_pre_header
      _
    $region3: #{tpu_custom_call.1} parent=1 // loop_header
      %s11 = sphi 0, %s15
      %p12 = scmp.ge.s32.totalorder %s11, 6
      %s21 = sphi 0, %s23
      %s24 = sphi 0, %s21
      %s25 = sphi 0, %s24
      %s41 = sphi 0, %s25
      %s45 = sphi 0, %s45
      %s47 = sphi 0, %s45
      %s48 = sphi 0, %s47
      %s62 = sphi 0, %s48
      %s68 = sphi 0, %s70
      %s71 = sphi 0, %s68
      %s72 = sphi 0, %s71
      %s88 = sphi 0, %s72
    $region4: #{tpu_custom_call.1} parent=1 // loop_header_branch
      %14 = sbr.rel (%p12) target = $region8
    $region5: #{tpu_custom_call.1} parent=1 // loop_body
      %s16 = ssub.s32 %s11, 1
      %s17 = ssub.s32 %s11, 2
      %s18 = sadd.s32 %s11, 1
      %s19 = ssub.s32 %s11, %s18
      %p20 = scmp.eq.s32.totalorder %s19, 0
      %s22 = sadd.s32 %s21, 1
      %s23 = scalar_select %p20, %s21, %s22
      %p26 = pneg %p20
      %p27 = scmp.eq.s32.totalorder %s11, 3
      %p28 = por %p26, %p27
      %p29 = scmp.ne.s32.totalorder %s21, %s24
      %p30 = scmp.eq.s32.totalorder %s11, 0
      %p31 = por %p29, %p30
      %p32 = scmp.ne.s32.totalorder %s21, %s24
      %p33 = scmp.eq.s32.totalorder %s16, 3
      %p34 = por %p32, %p33
      %p35 = scmp.ne.s32.totalorder %s24, %s25
      %p36 = scmp.eq.s32.totalorder %s16, 0
      %p37 = por %p35, %p36
      %p38 = scmp.ne.s32.totalorder %s24, %s25
      %p39 = scmp.eq.s32.totalorder %s17, 3
      %p40 = por %p38, %p39
      %p42 = scmp.ne.s32.totalorder %s25, %s41
      %p43 = scmp.eq.s32.totalorder %s17, 0
      %p44 = por %p42, %p43
      %s46 = sadd.s32 %s45, 1
      %p49 = scmp.eq.s32.totalorder %s11, 3
      %p50 = scmp.ne.s32.totalorder %s45, %s47
      %p51 = scmp.eq.s32.totalorder %s11, 0
      %p52 = por %p50, %p51
      %p53 = scmp.ne.s32.totalorder %s45, %s47
      %p54 = scmp.eq.s32.totalorder %s16, 3
      %p55 = por %p53, %p54
      %p56 = scmp.ne.s32.totalorder %s47, %s48
      %p57 = scmp.eq.s32.totalorder %s16, 0
      %p58 = por %p56, %p57
      %p59 = scmp.ne.s32.totalorder %s47, %s48
      %p60 = scmp.eq.s32.totalorder %s17, 3
      %p61 = por %p59, %p60
      %p63 = scmp.ne.s32.totalorder %s48, %s62
      %p64 = scmp.eq.s32.totalorder %s17, 0
      %p65 = por %p63, %p64
      %s66 = ssub.s32 %s11, %s18
      %p67 = scmp.eq.s32.totalorder %s66, 0
      %s69 = sadd.s32 %s68, 1
      %s70 = scalar_select %p67, %s68, %s69
      %p73 = pneg %p67
      %p74 = scmp.eq.s32.totalorder %s11, 3
      %p75 = por %p73, %p74
      %p76 = scmp.ne.s32.totalorder %s68, %s71
      %p77 = scmp.eq.s32.totalorder %s11, 0
      %p78 = por %p76, %p77
      %p79 = scmp.ne.s32.totalorder %s68, %s71
      %p80 = scmp.eq.s32.totalorder %s16, 3
      %p81 = por %p79, %p80
      %p82 = scmp.ne.s32.totalorder %s71, %s72
      %p83 = scmp.eq.s32.totalorder %s16, 0
      %p84 = por %p82, %p83
      %p85 = scmp.ne.s32.totalorder %s71, %s72
      %p86 = scmp.eq.s32.totalorder %s17, 3
      %p87 = por %p85, %p86
      %p89 = scmp.ne.s32.totalorder %s72, %s88
      %p90 = scmp.eq.s32.totalorder %s17, 0
      %p91 = por %p89, %p90
      %p92 = scmp.le.s32.totalorder 1, %s11
      %p93 = scmp.lt.s32.totalorder %s11, 5
      %p94 = pnand %p92, %p93
      %p95 = pneg %p94
      // Predicated region
      $region9: #{tpu_custom_call.1} parent=5 // pred_check
        _
      $region10: #{tpu_custom_call.1} parent=5 // pred_check_branch
        %97 = sbr.rel (%p94) target = $region12
      $region11: #{tpu_custom_call.1} parent=5 // pred_region
        %s98 = ssub.s32 %s11, 1
        // Predicated region
        $region13: #{tpu_custom_call.1} parent=11 // pred_check
          %p99 = pneg %p58
        $region14: #{tpu_custom_call.1} parent=11 // pred_check_branch
          %101 = sbr.rel (%p99) target = $region16
        $region15: #{tpu_custom_call.1} parent=11 // pred_region
          _
        $region16: #{tpu_custom_call.1} parent=11 // pred_fallthru
          _
      $region12: #{tpu_custom_call.1} parent=5 // pred_fallthru
        _
      %p102 = scmp.lt.s32.totalorder %s11, 4
      // Predicated region
      $region17: #{tpu_custom_call.1} parent=5 // pred_check
        %p103 = pneg %p102
      $region18: #{tpu_custom_call.1} parent=5 // pred_check_branch
        %105 = sbr.rel (%p103) target = $region20
      $region19: #{tpu_custom_call.1} parent=5 // pred_region
        // Predicated region
        $region21: #{tpu_custom_call.1} parent=19 // pred_check
          %p106 = pneg %p31
        $region22: #{tpu_custom_call.1} parent=19 // pred_check_branch
          %108 = sbr.rel (%p106) target = $region24
        $region23: #{tpu_custom_call.1} parent=19 // pred_region
          %s109 = smul.u32 2, %s11
          %p110 = scmp.lt.s32.totalorder %s109, 7
          %s111 = scalar_select %p110, %s109, 7
          %s112 = smul.addr %s111, 8
          %s113 = scalar_lea.vmem %s0, %s112
          %s114 = smul.u32 2, %s11
        $region24: #{tpu_custom_call.1} parent=19 // pred_fallthru
          _
      $region20: #{tpu_custom_call.1} parent=5 // pred_fallthru
        _
      %p115 = scmp.le.s32.totalorder 1, %s11
      %p116 = scmp.lt.s32.totalorder %s11, 5
      %p117 = pnand %p115, %p116
      %p118 = pneg %p117
      // Predicated region
      $region25: #{tpu_custom_call.1} parent=5 // pred_check
        _
      $region26: #{tpu_custom_call.1} parent=5 // pred_check_branch
        %120 = sbr.rel (%p117) target = $region28
      $region27: #{tpu_custom_call.1} parent=5 // pred_region
        %s121 = ssub.s32 %s11, 1
        %s122 = smul.u32 2, %s16
        %p123 = scmp.lt.s32.totalorder %s122, 7
        %s124 = scalar_select %p123, %s122, 7
        %s125 = smul.addr %s124, 8
        %s126 = scalar_lea.vmem %s0, %s125
        %p127 = pneg %p37
        %p128 = pneg %p34
        %p129 = pneg %p58
        %p130 = pneg %p55
        %p131 = pneg %p84
        %p132 = pneg %p81
        %s133 = sand.u32 %s71, 1
        %s134 = scalar_lea.sflag [#allocation3], %s133
        %s135 = sand.u32 %s71, 1
        %s136 = smul.addr %s135, 16
        %s137 = scalar_lea.vmem [#allocation2], %s136
        %s138 = smul.u32 2, %s16
        %p139 = scmp.lt.s32.totalorder %s138, 7
        %s140 = scalar_select %p139, %s138, 7
        %s141 = smul.addr %s140, 8
        %s142 = scalar_lea.vmem %s0, %s141
        %s143 = smul.u32 2, %s16
        %s144 = smul.u32 2, %s16
        %v146 = vld [vmem:[%s142] sm:$0xff]
        %v147 = vld [vmem:[%s142 + $0x8] sm:$0xff]
        %v148 = vpack.c.bf16 %v147, %v146
        %v149 = vld [vmem:[%s1] sm:$0xff]
        %v150 = vld [vmem:[%s1 + $0x8] sm:$0xff]
        %v151 = vld [vmem:[%s1 + $0x10] sm:$0xff]
        %v152 = vld [vmem:[%s1 + $0x18] sm:$0xff]
        %v153 = vld [vmem:[%s1 + $0x20] sm:$0xff]
        %v154 = vld [vmem:[%s1 + $0x28] sm:$0xff]
        %v155 = vld [vmem:[%s1 + $0x30] sm:$0xff]
        %v156 = vld [vmem:[%s1 + $0x38] sm:$0xff]
        %v157 = vld [vmem:[%s1 + $0x40] sm:$0xff]
        %v158 = vld [vmem:[%s1 + $0x48] sm:$0xff]
        %v159 = vld [vmem:[%s1 + $0x50] sm:$0xff]
        %v160 = vld [vmem:[%s1 + $0x58] sm:$0xff]
        %v161 = vpack.c.bf16 %v151, %v149
        %v162 = vpack.c.bf16 %v152, %v150
        %v163 = vpack.c.bf16 %v155, %v153
        %v164 = vpack.c.bf16 %v156, %v154
        %v165 = vpack.c.bf16 %v159, %v157
        %v166 = vpack.c.bf16 %v160, %v158
        %vm167 = vcmask 392192
        %v169 = vsel %vm167, %v148, 0
        %171 = vmatpush.bf16.msra.mxu0 0
        %172 = vmatpush.bf16.msra.mxu0 0
        %173 = vmatpush.bf16.msra.mxu0 0
        %174 = vmatpush.bf16.msra.mxu0 0
        %175 = vmatpush.bf16.msra.mxu0 0
        %176 = vmatpush.bf16.msra.mxu0 %v165
        %177 = vmatpush.bf16.msra.mxu0 %v163
        %178 = vmatpush.bf16.msra.mxu0 %v161
        %179 = vmatmul.bf16.gmra.mxu0 %v169
        %v180 = vpop.f32.mrf.mxu0
        %v181 = vadd.f32 0.0, %v180
        %v182 = vpop.f32.mrf.mxu0
        %v183 = vadd.f32 0.0, %v182
        %184 = vdwg.mxu0
        %185 = vmatpush.bf16.msra.mxu0 0
        %186 = vmatpush.bf16.msra.mxu0 0
        %187 = vmatpush.bf16.msra.mxu0 0
        %188 = vmatpush.bf16.msra.mxu0 0
        %189 = vmatpush.bf16.msra.mxu0 0
        %190 = vmatpush.bf16.msra.mxu0 %v166
        %191 = vmatpush.bf16.msra.mxu0 %v164
        %192 = vmatpush.bf16.msra.mxu0 %v162
        %193 = vmatmul.bf16.gmra.mxu0 %v169
        %v194 = vpop.f32.mrf.mxu0
        %v195 = vadd.f32 0.0, %v194
        %v196 = vpop.f32.mrf.mxu0
        %v197 = vadd.f32 0.0, %v196
        %198 = vdwg.mxu0
        %v199 = vpack.c.bf16 %v195, %v181
        %v200 = vpack.c.bf16 %v197, %v183
        %201 = vst [vmem:[%s137] sm:$0xff] %v199
        %202 = vst [vmem:[%s137 + $0x8] sm:$0xff] %v200
        %s203 = sand.u32 %s71, 1
        %s204 = scalar_lea.sflag [#allocation3], %s203
        %s205 = sand.u32 %s71, 1
        %s206 = smul.addr %s205, 16
        %s207 = scalar_lea.vmem [#allocation2], %s206
        // Predicated region
        $region29: #{tpu_custom_call.1} parent=27 // pred_check
          %p208 = pneg %p81
        $region30: #{tpu_custom_call.1} parent=27 // pred_check_branch
          %210 = sbr.rel (%p208) target = $region32
        $region31: #{tpu_custom_call.1} parent=27 // pred_region
          %s211 = smul.u32 2, %s16
          %213 = vsyncadd %s204, 0
          %s214 = smul.addr %s211, 2
          %s215 = smul.addr %s214, 4
          %s216 = scalar_lea.hbm %s2, %s215
          %s217 = sshll.u32 %s207, 4
          %s218 = int_to_ptr.vmem [resolvable:$true] %s217
          %s219 = sshll.u32 %s216, 4
          %s220 = int_to_ptr.hbm [resolvable:$true] %s219
          %225 = dma.vmem_to_hbm [thread:$0]  %s218, 256, %s220, %s204, 128, 128, 8
        $region32: #{tpu_custom_call.1} parent=27 // pred_fallthru
          _
      $region28: #{tpu_custom_call.1} parent=5 // pred_fallthru
        _
      %p226 = scmp.le.s32.totalorder 2, %s11
      // Predicated region
      $region33: #{tpu_custom_call.1} parent=5 // pred_check
        %p227 = pneg %p226
      $region34: #{tpu_custom_call.1} parent=5 // pred_check_branch
        %229 = sbr.rel (%p227) target = $region36
      $region35: #{tpu_custom_call.1} parent=5 // pred_region
        %s230 = ssub.s32 %s11, 2
        // Predicated region
        $region37: #{tpu_custom_call.1} parent=35 // pred_check
          %p231 = pneg %p87
        $region38: #{tpu_custom_call.1} parent=35 // pred_check_branch
          %233 = sbr.rel (%p231) target = $region40
        $region39: #{tpu_custom_call.1} parent=35 // pred_region
          %s234 = sand.u32 %s72, 1
          %s235 = scalar_lea.sflag [#allocation3], %s234
          %s236 = sand.u32 %s72, 1
          %s237 = smul.addr %s236, 16
          %s238 = scalar_lea.vmem [#allocation2], %s237
          %240 = dma.done %s235, 256
        $region40: #{tpu_custom_call.1} parent=35 // pred_fallthru
          _
      $region36: #{tpu_custom_call.1} parent=5 // pred_fallthru
        _
    $region6: #{tpu_custom_call.1} parent=1 // loop_footer
      %s15 = sadd.s32 1, %s11
    $region7: #{tpu_custom_call.1} parent=1 // loop_footer_branch
      %10 = sbr.rel target = $region3
    $region8: #{tpu_custom_call.1} parent=1 // loop_exit
      _
    %241 = vsyncpa [#allocation3], 1
    %s242 = scalar_lea.sflag [#allocation3], 1
    %243 = vsyncpa %s242, 1

</llo_original>
